<compile_context>
chip_gen: v6e
topology: v6e:2x2x1
jax: 0.10.0
libtpu: 0.0.40
codegen_flags: <defaults>
</compile_context>

<pallas_src>
import jax
import jax.numpy as jnp
from jax.experimental import pallas as pl
from jax.experimental.pallas import tpu as pltpu


def _choose_tile(dim, candidates, full_if_leq):
    """Pick a tile size and padded dim it divides. Returns (tile, padded_dim)."""
    if dim <= full_if_leq:
        return dim, dim                      # full-extent block (exempt from 8/128 rule)
    for t in candidates:
        if dim % t == 0:
            return t, dim
    # Perf fix: pad up to the LARGEST candidate instead of the smallest,
    # so awkward sizes never fall back to tiny MXU-starving tiles.
    t = candidates[0]
    return t, pl.cdiv(dim, t) * t


def bert_intermediate(hidden_states, weight, bias, *, compute_dtype=None):
    """GELU(hidden_states @ weight.T + bias) — matches torch nn.Linear + exact GELU.

    hidden_states: [B, S, H_in]
    weight:        [H_out, H_in]   (torch nn.Linear layout)
    bias:          [H_out]
    compute_dtype: optional MXU input dtype (e.g. jnp.bfloat16); accumulation,
                   bias add and GELU epilogue remain f32.
    """
    B, S, H_in = hidden_states.shape
    H_out, H_in_w = weight.shape
    assert H_in_w == H_in
    out_dtype = hidden_states.dtype
    M = B * S

    x2d = hidden_states.reshape(M, H_in)

    # One-time weight prep (in production this lives at parameter-setup time):
    # pre-transpose to [H_in, H_out] for an NN matmul and pre-cast to compute dtype.
    w_t = weight.T
    if compute_dtype is not None:
        w_t = w_t.astype(compute_dtype)
    b2d = bias.reshape(1, H_out).astype(jnp.float32)

    x_b = x2d.dtype.itemsize
    w_b = jnp.dtype(w_t.dtype).itemsize
    o_b = jnp.dtype(out_dtype).itemsize

    # --- Tile selection -----------------------------------------------------
    # Token (sublane) axis: cap at 256 (safe across v5e/v6e/v7x with the weight
    # resident, and leaves enough grid steps for megacore sharding on v7x).
    TM, M_pad = _choose_tile(M, (256, 128), full_if_leq=256)

    # Output-feature (lane) axis: keep the full weight resident in VMEM whenever
    # it is reasonably small (always true for hidden x hidden BERT layers);
    # otherwise tile N lane-densely (weight still read only once per N tile
    # because the feature axis is the OUTER grid axis).
    if H_in * H_out * w_b <= (8 << 20):
        TN, N_pad = H_out, H_out
    else:
        TN, N_pad = _choose_tile(H_out, (512, 256, 128), full_if_leq=512)

    if M_pad != M:
        x2d = jnp.pad(x2d, ((0, M_pad - M), (0, 0)))
    if N_pad != H_out:
        w_t = jnp.pad(w_t, ((0, 0), (0, N_pad - H_out)))
        b2d = jnp.pad(b2d, ((0, 0), (0, N_pad - H_out)))

    n_tiles_n = N_pad // TN
    n_tiles_m = M_pad // TM
    grid = (n_tiles_n, n_tiles_m)          # feature tiles OUTER, token tiles INNER

    # Weight block: constant index across the inner (token) axis -> DMA'd once per
    # feature tile (once total when n_tiles_n == 1). Single-buffer it when large.
    w_block_bytes = H_in * TN * w_b
    if w_block_bytes > (6 << 20):
        w_spec = pl.BlockSpec((H_in, TN), lambda j, i: (0, j),
                              pipeline_mode=pl.Buffered(1))
        w_bufs = 1
    else:
        w_spec = pl.BlockSpec((H_in, TN), lambda j, i: (0, j))
        w_bufs = 2

    # VMEM budget: double-buffered x / bias / out, weight buffers, plus room for the
    # compiler's f32 matmul result and GELU temporaries (~3 x TM*TN*4 B).
    vmem_est = (2 * TM * H_in * x_b
                + w_bufs * H_in * TN * w_b
                + 2 * TN * 4
                + 2 * TM * TN * o_b
                + 3 * TM * TN * 4)
    vmem_limit = int(min(max(vmem_est + (4 << 20), 32 << 20), 48 << 20))

    cost = pl.CostEstimate(
        flops=2 * M_pad * H_in * N_pad,
        transcendentals=M_pad * N_pad,
        bytes_accessed=(n_tiles_n * M_pad * H_in * x_b     # x read once per feature tile
                        + H_in * N_pad * w_b               # weight read exactly once
                        + N_pad * 4                        # bias
                        + M_pad * N_pad * o_b),            # output written once
    )

    def kernel(x_ref, w_ref, b_ref, o_ref):
        # x_ref: [TM, K]  tokens x hidden_in (original dtype)
        # w_ref: [K, TN]  pre-transposed weight tile (compute dtype), VMEM-resident
        # b_ref: [1, TN]  f32 bias tile
        # o_ref: [TM, TN]
        x = x_ref[...]
        if compute_dtype is not None and x.dtype != compute_dtype:
            x = x.astype(compute_dtype)     # cast inside the kernel: no extra HBM pass
        y = jnp.dot(x, w_ref[...], preferred_element_type=jnp.float32)
        y = y + b_ref[...]
        # Exact erf GELU (HF GELUActivation / torch.nn.GELU default), f32 epilogue.
        inv_sqrt2 = jnp.float32(0.7071067811865476)
        g = 0.5 * y * (1.0 + jax.lax.erf(y * inv_sqrt2))
        o_ref[...] = g.astype(o_ref.dtype)

    out2d = pl.pallas_call(
        kernel,
        out_shape=jax.ShapeDtypeStruct((M_pad, N_pad), out_dtype),
        grid_spec=pltpu.PrefetchScalarGridSpec(
            num_scalar_prefetch=0,
            grid=grid,
            in_specs=[
                pl.BlockSpec((TM, H_in), lambda j, i: (i, 0)),   # x tile
                w_spec,                                          # resident weight
                pl.BlockSpec((1, TN), lambda j, i: (0, j)),      # bias tile
            ],
            out_specs=pl.BlockSpec((TM, TN), lambda j, i: (i, j)),
        ),
        compiler_params=pltpu.CompilerParams(
            dimension_semantics=("parallel", "parallel"),
            vmem_limit_bytes=vmem_limit,
        ),
        cost_estimate=cost,
    )(x2d, w_t, b2d)

    if M_pad != M or N_pad != H_out:
        out2d = out2d[:M, :H_out]
    return out2d.reshape(B, S, H_out)


def _ref(hidden_states, weight, bias):
    y = jnp.matmul(hidden_states.astype(jnp.float32),
                   weight.astype(jnp.float32).T,
                   precision=jax.lax.Precision.HIGHEST) + bias.astype(jnp.float32)
    g = 0.5 * y * (1.0 + jax.lax.erf(y / jnp.sqrt(jnp.float32(2.0))))
    return g.astype(hidden_states.dtype)


if __name__ == "__main__":
    key = jax.random.PRNGKey(0)

    # --- Small-shape check (Linear(hidden, hidden) + exact GELU), single block ---
    B, S, H = 2, 8, 32
    kx, kw, kb, k2, k3 = jax.random.split(key, 5)
    x = jax.random.normal(kx, (B, S, H), dtype=jnp.float32)
    W = jax.random.normal(kw, (H, H), dtype=jnp.float32) * 0.02
    b = jax.random.normal(kb, (H,), dtype=jnp.float32) * 0.02

    out = jax.block_until_ready(bert_intermediate(x, W, b))
    ref = _ref(x, W, b)
    assert out.shape == (B, S, H)
    assert jnp.allclose(out, ref, atol=1e-5, rtol=1e-5)

    # --- Multi-tile token axis, weight fully resident, f32 ---
    B2, S2, H2 = 2, 320, 640      # M=640 -> TM=128 (5 token tiles), TN=H_out resident
    kx2, kw2, kb2 = jax.random.split(k2, 3)
    x2 = jax.random.normal(kx2, (B2, S2, H2), dtype=jnp.float32)
    W2 = jax.random.normal(kw2, (H2, H2), dtype=jnp.float32) * 0.02
    b2 = jax.random.normal(kb2, (H2,), dtype=jnp.float32) * 0.02

    out2 = jax.block_until_ready(bert_intermediate(x2, W2, b2))
    ref2 = _ref(x2, W2, b2)
    assert out2.shape == (B2, S2, H2)
    assert jnp.allclose(out2, ref2, atol=1e-3, rtol=1e-3)

    # --- bf16 MXU path (f32 accumulation + f32 epilogue), loose tolerance ---
    out2_bf16 = jax.block_until_ready(
        bert_intermediate(x2, W2, b2, compute_dtype=jnp.bfloat16))
    assert jnp.allclose(out2_bf16, ref2, atol=5e-2, rtol=5e-2)

    # --- Awkward M (exercises the fixed pad-to-largest-tile fallback) ---
    B3, S3, H3 = 1, 520, 256      # M=520 -> padded to 768, TM=256
    kx3, kw3, kb3 = jax.random.split(k3, 3)
    x3 = jax.random.normal(kx3, (B3, S3, H3), dtype=jnp.float32)
    W3 = jax.random.normal(kw3, (H3, H3), dtype=jnp.float32) * 0.02
    b3 = jax.random.normal(kb3, (H3,), dtype=jnp.float32) * 0.02

    out3 = jax.block_until_ready(bert_intermediate(x3, W3, b3))
    ref3 = _ref(x3, W3, b3)
    assert out3.shape == (B3, S3, H3)
    assert jnp.allclose(out3, ref3, atol=1e-3, rtol=1e-3)

    print("KERNEL_OK")
</pallas_src>

<mosaic_0001>
module attributes {stable_mosaic.version = 11 : i64} {
  func.func @kernel(%arg0: i32, %arg1: i32, %arg2: memref<16x32xf32, #tpu.memory_space<vmem>>, %arg3: memref<32x32xf32, #tpu.memory_space<vmem>>, %arg4: memref<1x32xf32, #tpu.memory_space<vmem>>, %arg5: memref<16x32xf32, #tpu.memory_space<vmem>>) attributes {dimension_semantics = [#tpu.dimension_semantics<parallel>, #tpu.dimension_semantics<parallel>], iteration_bounds = array<i64: 1, 1>, scalar_prefetch = 0 : i64, scratch_operands = 0 : i64, tpu.core_type = #tpu.core_type<tc>, window_params = [{transform_indices = @transform_0, window_bounds = array<i64: 16, 32>}, {transform_indices = @transform_1, window_bounds = array<i64: 32, 32>}, {transform_indices = @transform_2, window_bounds = array<i64: 1, 32>}, {transform_indices = @transform_3, window_bounds = array<i64: 16, 32>}]} {
    %c0 = arith.constant 0 : index
    %c0_0 = arith.constant 0 : index
    %0 = vector.load %arg2[%c0, %c0_0] : memref<16x32xf32, #tpu.memory_space<vmem>>, vector<16x32xf32>
    %c0_1 = arith.constant 0 : index
    %c0_2 = arith.constant 0 : index
    %1 = vector.load %arg3[%c0_1, %c0_2] : memref<32x32xf32, #tpu.memory_space<vmem>>, vector<32x32xf32>
    %cst = arith.constant dense<0.000000e+00> : vector<16x32xf32>
    %2 = tpu.matmul %0, %1, %cst {dimension_numbers = #tpu.dot_dimension_numbers<[1], [0], [0], [1], [0, 0, 1, 1], [], []>} : vector<16x32xf32>, vector<32x32xf32>, vector<16x32xf32> -> vector<16x32xf32>
    %c0_3 = arith.constant 0 : index
    %c0_4 = arith.constant 0 : index
    %3 = vector.load %arg4[%c0_3, %c0_4] : memref<1x32xf32, #tpu.memory_space<vmem>>, vector<1x32xf32>
    %4 = vector.broadcast %3 : vector<1x32xf32> to vector<16x32xf32>
    %5 = arith.addf %2, %4 : vector<16x32xf32>
    %cst_5 = arith.constant 5.000000e-01 : f32
    %6 = vector.broadcast %cst_5 : f32 to vector<16x32xf32>
    %7 = arith.mulf %6, %5 : vector<16x32xf32>
    %cst_6 = arith.constant 0.707106769 : f32
    %8 = vector.broadcast %cst_6 : f32 to vector<16x32xf32>
    %9 = arith.mulf %5, %8 : vector<16x32xf32>
    %10 = math.erf %9 : vector<16x32xf32>
    %cst_7 = arith.constant 1.000000e+00 : f32
    %11 = vector.broadcast %cst_7 : f32 to vector<16x32xf32>
    %12 = arith.addf %11, %10 : vector<16x32xf32>
    %13 = arith.mulf %7, %12 : vector<16x32xf32>
    %c0_8 = arith.constant 0 : index
    %c0_9 = arith.constant 0 : index
    %14 = vector.load %arg5[%c0_8, %c0_9] : memref<16x32xf32, #tpu.memory_space<vmem>>, vector<16x32xf32>
    tpu.vector_store %arg5[%c0_8, %c0_9], %13 {strides = array<i32>} : memref<16x32xf32, #tpu.memory_space<vmem>>, vector<16x32xf32>,
    return
  }
  func.func @transform_0(%arg0: i32, %arg1: i32) -> (i32, i32) {
    %c0_i32 = arith.constant 0 : i32
    %c0_i32_0 = arith.constant 0 : i32
    return %arg1, %c0_i32 : i32, i32
  }
  func.func @transform_1(%arg0: i32, %arg1: i32) -> (i32, i32) {
    %c0_i32 = arith.constant 0 : i32
    %c0_i32_0 = arith.constant 0 : i32
    return %c0_i32, %arg0 : i32, i32
  }
  func.func @transform_2(%arg0: i32, %arg1: i32) -> (i32, i32) {
    %c0_i32 = arith.constant 0 : i32
    %c0_i32_0 = arith.constant 0 : i32
    return %c0_i32, %arg0 : i32, i32
  }
  func.func @transform_3(%arg0: i32, %arg1: i32) -> (i32, i32) {
    %c0_i32 = arith.constant 0 : i32
    return %arg1, %arg0 : i32, i32
  }
}

</mosaic_0001>

<llo_original>
// kernel: tpu_custom_call.1
$region0: #{tpu_custom_call.1}
  #allocation0 [shape = 'u32[]', space=smem, size = 0x4, offset = 0x4, fixed_abs, tag = 'smem constant byte address 0x4 - core index']
  #allocation1 [shape = 'u32[144,128]{1,0:T(1,128)}', space=vmem, size = 0x12000, scoped, tag = 'internal scratch']
  %s0 = inlined_call_operand.hbm [shape: f32[16,32], index: 0, kind: input, shape index: {}]
  %s1 = inlined_call_operand.hbm [shape: f32[32,32], index: 1, kind: input, shape index: {}]
  %s2 = inlined_call_operand.vmem [shape: f32[1,32], index: 2, kind: input, shape index: {}]
  %s3 = inlined_call_operand.hbm [shape: f32[16,32], index: 3, kind: output, shape index: {}]
  %s4 = sld [smem:[#allocation0]]
  $region30: #{tpu_custom_call.1} parent=0
    _
  %s6 = ssub.s32 1, %s4
  %s7 = scalar_select 0, %s6, %s4
  $region1: #{tpu_custom_call.1} parent=0
    #allocation2 [shape = 'u8[8192]{0}', space=vmem, size = 0x2000, scoped, tag = 'input window, operand 0, single buffered']
    #allocation3 [shape = 's32[1]{0}', space=sflag, size = 0x4, scoped, tag = 'scoped memory for tpu_custom_call.1']
    #allocation4 [shape = 's32[1]{0}', space=sflag, size = 0x4, scoped, tag = 'scoped memory for tpu_custom_call.1']
    #allocation5 [shape = 'u8[16384]{0}', space=vmem, size = 0x4000, scoped, tag = 'input window, operand 1, single buffered']
    #allocation6 [shape = 's32[1]{0}', space=sflag, size = 0x4, scoped, tag = 'scoped memory for tpu_custom_call.1']
    #allocation7 [shape = 'u8[8192]{0}', space=vmem, size = 0x2000, scoped, tag = 'output window, operand 0, single buffered']
    %8 = vsyncpa [#allocation3], 0
    %9 = vsyncpa [#allocation6], 0
    %10 = vsyncpa [#allocation4], 0
    // Predicated region
    $region2: #{tpu_custom_call.1} parent=1 // pred_check
      _
    $region3: #{tpu_custom_call.1} parent=1 // pred_check_branch
      %12 = sbr.rel (0) target = $region5
    $region4: #{tpu_custom_call.1} parent=1 // pred_region
      %s14 = ssub.s32 256, 256
      %15 = vsyncadd [#allocation3], %s14
      %s16 = sshll.u32 [#allocation2], 4
      %s17 = int_to_ptr.vmem [resolvable:$true] %s16
      %22 = dma.hbm_to_vmem [thread:$0]  %s0, 256, %s17, [#allocation3], 128, 128, 8
    $region5: #{tpu_custom_call.1} parent=1 // pred_fallthru
      _
    // Predicated region
    $region6: #{tpu_custom_call.1} parent=1 // pred_check
      _
    $region7: #{tpu_custom_call.1} parent=1 // pred_check_branch
      %24 = sbr.rel (0) target = $region9
    $region8: #{tpu_custom_call.1} parent=1 // pred_region
      %s26 = ssub.s32 512, 512
      %27 = vsyncadd [#allocation6], %s26
      %s28 = sshll.u32 [#allocation5], 4
      %s29 = int_to_ptr.vmem [resolvable:$true] %s28
      %34 = dma.hbm_to_vmem [thread:$0]  %s1, 512, %s29, [#allocation6], 128, 128, 8
    $region9: #{tpu_custom_call.1} parent=1 // pred_fallthru
      _
    // Predicated region
    $region10: #{tpu_custom_call.1} parent=1 // pred_check
      _
    $region11: #{tpu_custom_call.1} parent=1 // pred_check_branch
      %36 = sbr.rel (0) target = $region13
    $region12: #{tpu_custom_call.1} parent=1 // pred_region
      _
    $region13: #{tpu_custom_call.1} parent=1 // pred_fallthru
      _
    // Predicated region
    $region14: #{tpu_custom_call.1} parent=1 // pred_check
      _
    $region15: #{tpu_custom_call.1} parent=1 // pred_check_branch
      %38 = sbr.rel (0) target = $region17
    $region16: #{tpu_custom_call.1} parent=1 // pred_region
      %39 = dma.done [#allocation3], 256
    $region17: #{tpu_custom_call.1} parent=1 // pred_fallthru
      _
    // Predicated region
    $region18: #{tpu_custom_call.1} parent=1 // pred_check
      _
    $region19: #{tpu_custom_call.1} parent=1 // pred_check_branch
      %41 = sbr.rel (0) target = $region21
    $region20: #{tpu_custom_call.1} parent=1 // pred_region
      %42 = dma.done [#allocation6], 512
    $region21: #{tpu_custom_call.1} parent=1 // pred_fallthru
      _
    %v43 = vld [vmem:[#allocation2] sm:$0xff]
    %v44 = vld [vmem:[#allocation2 + $0x8] sm:$0xff]
    %v45 = vld [vmem:[#allocation5] sm:$0xff]
    %v46 = vld [vmem:[#allocation5 + $0x8] sm:$0xff]
    %v47 = vld [vmem:[#allocation5 + $0x10] sm:$0xff]
    %v48 = vld [vmem:[#allocation5 + $0x18] sm:$0xff]
    %v49 = vld [vmem:[%s2] sm:$0x1]
    %v51 = vlaneseq
    %v52 = vshrl.u32 %v51, 7
    %v53 = vsub.s32 0, %v52
    %v54 = vrot.slane %v49, %v53
    %vm56 = vcmask 261120
    %v58 = vsel %vm56, %v43, 0
    %v61 = vsel %vm56, %v44, 0
    %63 = vmatprep.subr.mxu0 0.0
    %64 = vmatpush1.msra.mxu0 0.0
    %65 = vmatprep.subr.mxu0 0.0
    %66 = vmatpush1.msra.mxu0 0.0
    %67 = vmatprep.subr.mxu0 0.0
    %68 = vmatpush1.msra.mxu0 0.0
    %69 = vmatprep.subr.mxu0 0.0
    %70 = vmatpush1.msra.mxu0 0.0
    %71 = vmatprep.subr.mxu0 0.0
    %72 = vmatpush1.msra.mxu0 0.0
    %73 = vmatprep.subr.mxu0 0.0
    %74 = vmatpush1.msra.mxu0 0.0
    %75 = vmatprep.subr.mxu0 0.0
    %76 = vmatpush1.msra.mxu0 0.0
    %77 = vmatprep.subr.mxu0 0.0
    %78 = vmatpush1.msra.mxu0 0.0
    %79 = vmatprep.subr.mxu0 0.0
    %80 = vmatpush1.msra.mxu0 0.0
    %81 = vmatprep.subr.mxu0 0.0
    %82 = vmatpush1.msra.mxu0 0.0
    %83 = vmatprep.subr.mxu0 0.0
    %84 = vmatpush1.msra.mxu0 0.0
    %85 = vmatprep.subr.mxu0 0.0
    %86 = vmatpush1.msra.mxu0 0.0
    %87 = vmatprep.subr.mxu0 0.0
    %88 = vmatpush1.msra.mxu0 %v48
    %89 = vmatprep.subr.mxu0 0.0
    %90 = vmatpush1.msra.mxu0 %v47
    %91 = vmatprep.subr.mxu0 0.0
    %92 = vmatpush1.msra.mxu0 %v46
    %93 = vmatprep.subr.mxu0 0.0
    %94 = vmatpush1.msra.mxu0 %v45
    %95 = vmatprep.subr.mxu0 0.0
    %96 = vmatpush2.msra.mxu0 0.0
    %97 = vmatprep.subr.mxu0 0.0
    %98 = vmatpush2.msra.mxu0 0.0
    %99 = vmatprep.subr.mxu0 0.0
    %100 = vmatpush2.msra.mxu0 0.0
    %101 = vmatprep.subr.mxu0 0.0
    %102 = vmatpush2.msra.mxu0 0.0
    %103 = vmatprep.subr.mxu0 0.0
    %104 = vmatpush2.msra.mxu0 0.0
    %105 = vmatprep.subr.mxu0 0.0
    %106 = vmatpush2.msra.mxu0 0.0
    %107 = vmatprep.subr.mxu0 0.0
    %108 = vmatpush2.msra.mxu0 0.0
    %109 = vmatprep.subr.mxu0 0.0
    %110 = vmatpush2.msra.mxu0 0.0
    %111 = vmatprep.subr.mxu0 0.0
    %112 = vmatpush2.msra.mxu0 0.0
    %113 = vmatprep.subr.mxu0 0.0
    %114 = vmatpush2.msra.mxu0 0.0
    %115 = vmatprep.subr.mxu0 0.0
    %116 = vmatpush2.msra.mxu0 0.0
    %117 = vmatprep.subr.mxu0 0.0
    %118 = vmatpush2.msra.mxu0 0.0
    %119 = vmatprep.subr.mxu0 0.0
    %120 = vmatpush2.msra.mxu0 0.0
    %121 = vmatprep.subr.mxu0 0.0
    %122 = vmatpush2.msra.mxu0 0.0
    %123 = vmatprep.subr.mxu0 0.0
    %124 = vmatpush2.msra.mxu0 0.0
    %125 = vmatprep.subr.mxu0 0.0
    %126 = vmatpush2.msra.mxu0 0.0
    %127 = vmatprep.mubr.f32.mxu0 0.0
    %128 = vmatmul.mubr.f32.gmra.mxu0 %v58
    %v129 = vpop.f32.mrf.mxu0
    %v130 = vadd.f32 %v54, %v129
    %v131 = vpop.f32.mrf.mxu0
    %132 = vmatprep.mubr.f32.mxu0 0.0
    %133 = vmatmul.mubr.f32.gmra.mxu0 %v61
    %v134 = vpop.f32.mrf.mxu0
    %v135 = vadd.f32 %v54, %v134
    %v136 = vpop.f32.mrf.mxu0
    %137 = vdwg.mxu0
    %v138 = vmul.f32 %v130, 0.5
    %v139 = vmul.f32 %v135, 0.5
    %v140 = vmul.f32 %v130, 0.70710677
    %v141 = vmul.f32 %v135, 0.70710677
    %v142 = verf.f32.pop %v140
    %v143 = verf.f32.pop %v141
    %v144 = vadd.f32 %v142, 1.0
    %v145 = vadd.f32 %v143, 1.0
    %v146 = vmul.f32 %v138, %v144
    %v147 = vmul.f32 %v139, %v145
    %148 = vst.msk [vmem:[#allocation7] sm:$0xff] %vm56, %v146
    %149 = vst.msk [vmem:[#allocation7 + $0x8] sm:$0xff] %vm56, %v147
    // Predicated region
    $region22: #{tpu_custom_call.1} parent=1 // pred_check
      _
    $region23: #{tpu_custom_call.1} parent=1 // pred_check_branch
      %151 = sbr.rel (0) target = $region25
    $region24: #{tpu_custom_call.1} parent=1 // pred_region
      %s153 = ssub.s32 256, 256
      %154 = vsyncadd [#allocation4], %s153
      %s155 = sshll.u32 [#allocation7], 4
      %s156 = int_to_ptr.vmem [resolvable:$true] %s155
      %161 = dma.vmem_to_hbm [thread:$0]  %s156, 256, %s3, [#allocation4], 128, 128, 8
    $region25: #{tpu_custom_call.1} parent=1 // pred_fallthru
      _
    // Predicated region
    $region26: #{tpu_custom_call.1} parent=1 // pred_check
      _
    $region27: #{tpu_custom_call.1} parent=1 // pred_check_branch
      %163 = sbr.rel (0) target = $region29
    $region28: #{tpu_custom_call.1} parent=1 // pred_region
      %164 = dma.done [#allocation4], 256
    $region29: #{tpu_custom_call.1} parent=1 // pred_fallthru
      _
    %165 = vsyncpa [#allocation3], 1
    %166 = vsyncpa [#allocation6], 1
    %167 = vsyncpa [#allocation4], 1

</llo_original>
